<compile_context>
chip_gen: v6e
topology: v6e:2x2x1
jax: 0.10.0
libtpu: 0.0.40
codegen_flags: <defaults>
</compile_context>

<pallas_src>
import numpy as np
import jax
import jax.numpy as jnp
from jax.experimental import pallas as pl
from jax.experimental.pallas import tpu as pltpu

CODES = dict(zip("ACGTN", range(5)))
NUM_CHANNELS = 4          # A, C, G, T ('N' column dropped, rows become 0.25)
_LANE = 128               # TPU lane width
_SUBLANES = 8             # f32 sublane tile height
_PAD_CODE = 5             # outside 0..4 -> all-zero columns in padded regions

# Per pipeline buffer (codes block + out block), counting Mosaic sublane padding:
#   out block  : TB * 8 * TL * out_bytes   (4 channel rows padded to 8 sublanes)
#   codes block: TB * 32 * TL              (int8, 1 row padded to 32 sublanes)
# Double-buffered total stays ~16 MiB; explicit 32 MiB limit gives margin on v5e
# (128 MiB physical) and is within v7x's 64 MiB physical VMEM.
_VMEM_PER_BUFFER = 8 * 1024 * 1024
_VMEM_LIMIT = 32 * 1024 * 1024

# ASCII -> code lookup table (vectorized replacement for the per-char loop).
_LUT = np.full(256, -1, dtype=np.int8)
for _ch, _v in CODES.items():
    _LUT[ord(_ch)] = np.int8(_v)
    _LUT[ord(_ch.lower())] = np.int8(_v)


def _seq2tensor_kernel(codes_ref, out_ref):
    """codes_ref: (..., 1, TL) int8 ; out_ref: (..., 4, TL) float.

    Handles both the single-sequence 2-D layout ((1,TL) -> (4,TL)) and the
    batched 3-D layout ((TB,1,TL) -> (TB,4,TL)). One dense store per block;
    compares/selects are VPU work hidden under the HBM write bound.
    """
    codes = codes_ref[...].astype(jnp.int32)                       # widen once
    chan_axis = len(out_ref.shape) - 2                             # channel dim
    chan = jax.lax.broadcasted_iota(jnp.int32, out_ref.shape, chan_axis)
    onehot = (codes == chan).astype(out_ref.dtype)                 # bcast over channels
    quarter = jnp.asarray(0.25, dtype=out_ref.dtype)
    out_ref[...] = jnp.where(codes == 4, quarter, onehot)          # 'N' -> 0.25


def _encode(seq):
    """DNA string -> int8 codes (ACGTN -> 0..4); KeyError on unknown chars."""
    raw = np.frombuffer(seq.encode("latin-1"), dtype=np.uint8)
    codes = _LUT[raw]
    bad = np.nonzero(codes < 0)[0]
    if bad.size:
        raise KeyError(seq[int(bad[0])])
    return codes


def _tile_sizes(B, L, out_bytes):
    """(TB, TL): batch rows per block and lanes per block."""
    tb = B if B < _SUBLANES else _SUBLANES
    if L <= _LANE:
        return tb, L            # one tiny block; lane dim == full array extent
    # lanes from the VMEM budget (sublane padding counted)
    tl = _VMEM_PER_BUFFER // (tb * (_SUBLANES * out_bytes + 32))
    # keep >=2 length blocks when the sequence allows it so a 2-TC chip (v7x)
    # can split the grid; harmless on single-core v5e/v6e.
    half = pl.cdiv(pl.cdiv(L, 2), _LANE) * _LANE
    tl = min(tl, half)
    tl = max(_LANE, (tl // _LANE) * _LANE)                          # lane-dense
    return tb, tl


def seq2tensor(seq, out_dtype=jnp.float32):
    """Forward pass of Seq2Tensor for a single sequence -> (4, L).

    `seq` may be a float jax array (returned unchanged, mirroring the
    `isinstance(seq, torch.FloatTensor)` early-exit) or a DNA string.
    Pass out_dtype=jnp.bfloat16 for half the output HBM traffic (bit-exact).
    """
    if isinstance(seq, (jnp.ndarray, jax.Array)) and jnp.issubdtype(
        seq.dtype, jnp.floating
    ):
        return seq

    codes = _encode(seq)
    L = int(codes.shape[0])
    out_bytes = jnp.dtype(out_dtype).itemsize
    _, tl = _tile_sizes(1, L, out_bytes)
    gl = pl.cdiv(L, tl)

    codes_pad = np.full((1, gl * tl), _PAD_CODE, dtype=np.int8)
    codes_pad[0, :L] = codes

    return pl.pallas_call(
        _seq2tensor_kernel,
        out_shape=jax.ShapeDtypeStruct((NUM_CHANNELS, L), out_dtype),
        grid=(gl,),
        in_specs=[pl.BlockSpec((1, tl), lambda i: (0, i))],
        out_specs=pl.BlockSpec((NUM_CHANNELS, tl), lambda i: (0, i)),
        compiler_params=pltpu.CompilerParams(
            dimension_semantics=("parallel",),
            vmem_limit_bytes=_VMEM_LIMIT,
        ),
    )(jnp.asarray(codes_pad))


def seq2tensor_batch(seqs, out_dtype=jnp.float32):
    """One-hot a batch of DNA strings with a single pallas_call.

    Returns (out, lengths): out is (B, 4, Lmax); columns past each sequence's
    length are all-zero. Batching amortizes host encoding, the H2D copy, the
    kernel launch and per-grid-step overhead.
    """
    codes_list = [_encode(s) for s in seqs]
    lengths = [int(c.shape[0]) for c in codes_list]
    B, Lmax = len(codes_list), max(lengths)
    out_bytes = jnp.dtype(out_dtype).itemsize
    tb, tl = _tile_sizes(B, Lmax, out_bytes)
    gb, gl = pl.cdiv(B, tb), pl.cdiv(Lmax, tl)

    codes_pad = np.full((gb * tb, 1, gl * tl), _PAD_CODE, dtype=np.int8)
    for b, c in enumerate(codes_list):
        codes_pad[b, 0, : c.shape[0]] = c

    out = pl.pallas_call(
        _seq2tensor_kernel,
        out_shape=jax.ShapeDtypeStruct((B, NUM_CHANNELS, Lmax), out_dtype),
        grid=(gb, gl),
        in_specs=[pl.BlockSpec((tb, 1, tl), lambda b, i: (b, 0, i))],
        out_specs=pl.BlockSpec((tb, NUM_CHANNELS, tl), lambda b, i: (b, 0, i)),
        compiler_params=pltpu.CompilerParams(
            dimension_semantics=("parallel", "parallel"),
            vmem_limit_bytes=_VMEM_LIMIT,
        ),
    )(jnp.asarray(codes_pad))
    return out, lengths


def _reference(seq):
    # pure numpy reference reproducing the PyTorch semantics
    codes = np.array([CODES[ch.upper()] for ch in seq], dtype=np.int64)
    onehot = np.eye(5, dtype=np.float32)[codes]          # (L, 5)
    onehot[onehot[:, 4] == 1] = 0.25                     # 'N' rows -> 0.25
    return onehot[:, :4].T                               # (4, L)


if __name__ == "__main__":
    key = jax.random.PRNGKey(0)
    k1, k2, k3, k4 = jax.random.split(key, 4)
    alphabet = "ACGTN"

    def rand_seq(k, n):
        idx = np.asarray(jax.random.randint(k, (n,), 0, 5))
        return "".join(alphabet[i] for i in idx)

    # 1) single short sequence (L=16): exact values / shape / dtype
    s16 = rand_seq(k1, 16)
    out = jax.block_until_ready(seq2tensor(s16))
    assert out.shape == (4, 16), out.shape
    assert out.dtype == jnp.float32, out.dtype
    np.testing.assert_array_equal(np.asarray(out), _reference(s16))

    # 2) non-multiple-of-128 length: ragged last block + 2-step grid, no post slice
    s300 = rand_seq(k2, 300)
    out2 = jax.block_until_ready(seq2tensor(s300))
    assert out2.shape == (4, 300), out2.shape
    np.testing.assert_array_equal(np.asarray(out2), _reference(s300))

    # 3) bf16 output path is bit-exact for {0, 0.25, 1}
    out_bf16 = jax.block_until_ready(seq2tensor(s300, out_dtype=jnp.bfloat16))
    assert out_bf16.dtype == jnp.bfloat16
    np.testing.assert_array_equal(
        np.asarray(out_bf16.astype(jnp.float32)), _reference(s300)
    )

    # 4) batched path: one launch for several sequences, padded columns are zero
    seqs = [rand_seq(k3, 8), rand_seq(k4, 32), "ACGTNacgtn"]
    outb, lens = seq2tensor_batch(seqs)
    outb = jax.block_until_ready(outb)
    assert outb.shape == (3, 4, 32), outb.shape
    for b, (s, l) in enumerate(zip(seqs, lens)):
        np.testing.assert_array_equal(np.asarray(outb[b, :, :l]), _reference(s))
        np.testing.assert_array_equal(np.asarray(outb[b, :, l:]), 0.0)

    # 5) float-tensor passthrough branch
    x = jax.random.normal(k1, (4, 16), dtype=jnp.float32)
    y = seq2tensor(x)
    assert y is x

    print("KERNEL_OK")
</pallas_src>

<mosaic_0001>
module attributes {stable_mosaic.version = 11 : i64} {
  func.func @_seq2tensor_kernel(%arg0: i32, %arg1: memref<1x16xi8, #tpu.memory_space<vmem>>, %arg2: memref<4x16xf32, #tpu.memory_space<vmem>>) attributes {dimension_semantics = [#tpu.dimension_semantics<parallel>], iteration_bounds = array<i64: 1>, scalar_prefetch = 0 : i64, scratch_operands = 0 : i64, tpu.core_type = #tpu.core_type<tc>, window_params = [{transform_indices = @transform_0, window_bounds = array<i64: 1, 16>}, {transform_indices = @transform_1, window_bounds = array<i64: 4, 16>}]} {
    %c0 = arith.constant 0 : index
    %c0_0 = arith.constant 0 : index
    %0 = vector.load %arg1[%c0, %c0_0] : memref<1x16xi8, #tpu.memory_space<vmem>>, vector<1x16xi8>
    %1 = arith.extsi %0 : vector<1x16xi8> to vector<1x16xi32>
    %2 = tpu.iota {dimensions = array<i32: 0>} : vector<4x16xi32>
    %3 = vector.broadcast %1 : vector<1x16xi32> to vector<4x16xi32>
    %4 = arith.cmpi eq, %3, %2 : vector<4x16xi32>
    %5 = arith.extui %4 : vector<4x16xi1> to vector<4x16xi32>
    %6 = arith.sitofp %5 : vector<4x16xi32> to vector<4x16xf32>
    %c4_i32 = arith.constant 4 : i32
    %7 = vector.broadcast %c4_i32 : i32 to vector<1x16xi32>
    %8 = arith.cmpi eq, %1, %7 : vector<1x16xi32>
    %cst = arith.constant 2.500000e-01 : f32
    %9 = vector.shape_cast %8 : vector<1x16xi1> to vector<1x16xi1>
    %10 = vector.broadcast %9 : vector<1x16xi1> to vector<4x16xi1>
    %11 = vector.broadcast %cst : f32 to vector<4x16xf32>
    %12 = arith.select %10, %11, %6 : vector<4x16xi1>, vector<4x16xf32>
    %c0_1 = arith.constant 0 : index
    %c0_2 = arith.constant 0 : index
    %13 = vector.load %arg2[%c0_1, %c0_2] : memref<4x16xf32, #tpu.memory_space<vmem>>, vector<4x16xf32>
    tpu.vector_store %arg2[%c0_1, %c0_2], %12 {strides = array<i32>} : memref<4x16xf32, #tpu.memory_space<vmem>>, vector<4x16xf32>,
    return
  }
  func.func @transform_0(%arg0: i32) -> (i32, i32) {
    %c0_i32 = arith.constant 0 : i32
    %c0_i32_0 = arith.constant 0 : i32
    return %c0_i32, %arg0 : i32, i32
  }
  func.func @transform_1(%arg0: i32) -> (i32, i32) {
    %c0_i32 = arith.constant 0 : i32
    %c0_i32_0 = arith.constant 0 : i32
    return %c0_i32, %arg0 : i32, i32
  }
}

</mosaic_0001>

<llo_original>
// kernel: tpu_custom_call.1
$region0: #{tpu_custom_call.1}
  #allocation0 [shape = 'u32[]', space=smem, size = 0x4, offset = 0x4, fixed_abs, tag = 'smem constant byte address 0x4 - core index']
  #allocation1 [shape = 'u32[144,128]{1,0:T(1,128)}', space=vmem, size = 0x12000, scoped, tag = 'internal scratch']
  %s0 = inlined_call_operand.hbm [shape: s8[1,16], index: 0, kind: input, shape index: {}]
  %s1 = inlined_call_operand.hbm [shape: f32[4,16], index: 1, kind: output, shape index: {}]
  %s2 = sld [smem:[#allocation0]]
  $region18: #{tpu_custom_call.1} parent=0
    _
  %s4 = ssub.s32 1, %s2
  %s5 = scalar_select 0, %s4, %s2
  $region1: #{tpu_custom_call.1} parent=0
    #allocation2 [shape = 'u8[512]{0}', space=vmem, size = 0x400, scoped, tag = 'input window, operand 0, single buffered']
    #allocation3 [shape = 's32[1]{0}', space=sflag, size = 0x4, scoped, tag = 'scoped memory for tpu_custom_call.1']
    #allocation4 [shape = 's32[1]{0}', space=sflag, size = 0x4, scoped, tag = 'scoped memory for tpu_custom_call.1']
    #allocation5 [shape = 'u8[2048]{0}', space=vmem, size = 0x800, scoped, tag = 'output window, operand 0, single buffered']
    %6 = vsyncpa [#allocation3], 0
    %7 = vsyncpa [#allocation4], 0
    // Predicated region
    $region2: #{tpu_custom_call.1} parent=1 // pred_check
      _
    $region3: #{tpu_custom_call.1} parent=1 // pred_check_branch
      %9 = sbr.rel (0) target = $region5
    $region4: #{tpu_custom_call.1} parent=1 // pred_region
      %s11 = ssub.s32 16, 16
      %12 = vsyncadd [#allocation3], %s11
      %s14 = sshll.u32 [#allocation2], 4
      %s15 = int_to_ptr.vmem [resolvable:$true] %s14
      %17 = dma.hbm_to_vmem [thread:$0]  %s0, 16, %s15, [#allocation3]
    $region5: #{tpu_custom_call.1} parent=1 // pred_fallthru
      _
    // Predicated region
    $region6: #{tpu_custom_call.1} parent=1 // pred_check
      _
    $region7: #{tpu_custom_call.1} parent=1 // pred_check_branch
      %19 = sbr.rel (0) target = $region9
    $region8: #{tpu_custom_call.1} parent=1 // pred_region
      %20 = dma.done [#allocation3], 16
    $region9: #{tpu_custom_call.1} parent=1 // pred_fallthru
      _
    %v21 = vld [vmem:[#allocation2] sm:$0x1]
    %v22 = vunpack.c.0.s8 %v21
    %v23 = vlaneseq
    %v24 = vshrl.u32 %v23, 7
    %v25 = vlaneseq
    %v26 = vshrl.u32 %v25, 7
    %v27 = vsub.s32 0, %v26
    %v28 = vrot.slane %v22, %v27
    %vm29 = vcmp.eq.s32.totalorder %v28, %v24
    %v30 = vsel %vm29, 1, 0
    %v31 = vcvt.s32.f32 %v30
    %vm32 = vcmp.eq.s32.totalorder %v22, 4
    %v33 = vsel %vm32, 1, 0
    %v34 = vlaneseq
    %v35 = vshrl.u32 %v34, 7
    %v36 = vsub.s32 0, %v35
    %v37 = vrot.slane %v33, %v36
    %vm38 = vcmp.eq.s32.totalorder %v37, 1
    %v39 = vsel %vm38, 0.25, %v31
    %vm40 = vcmask 125952
    %41 = vst.msk [vmem:[#allocation5] sm:$0xf] %vm40, %v39
    // Predicated region
    $region10: #{tpu_custom_call.1} parent=1 // pred_check
      _
    $region11: #{tpu_custom_call.1} parent=1 // pred_check_branch
      %43 = sbr.rel (0) target = $region13
    $region12: #{tpu_custom_call.1} parent=1 // pred_region
      %s45 = ssub.s32 64, 64
      %46 = vsyncadd [#allocation4], %s45
      %s48 = sshll.u32 [#allocation5], 4
      %s49 = int_to_ptr.vmem [resolvable:$true] %s48
      %51 = dma.vmem_to_hbm [thread:$0]  %s49, 64, %s1, [#allocation4]
    $region13: #{tpu_custom_call.1} parent=1 // pred_fallthru
      _
    // Predicated region
    $region14: #{tpu_custom_call.1} parent=1 // pred_check
      _
    $region15: #{tpu_custom_call.1} parent=1 // pred_check_branch
      %53 = sbr.rel (0) target = $region17
    $region16: #{tpu_custom_call.1} parent=1 // pred_region
      %54 = dma.done [#allocation4], 64
    $region17: #{tpu_custom_call.1} parent=1 // pred_fallthru
      _
    %55 = vsyncpa [#allocation3], 1
    %56 = vsyncpa [#allocation4], 1

</llo_original>
